<compile_context>
chip_gen: v7x
topology: tpu7x:2x2x1
jax: 0.10.0
libtpu: 0.0.40
codegen_flags: <defaults>
</compile_context>

<pallas_src>
import numpy as np
import jax
import jax.numpy as jnp
from jax import lax
from jax.experimental import pallas as pl
from jax.experimental.pallas import tpu as pltpu


# ----------------------------------------------------------------------------
# pltpu.roll direction probe
# ----------------------------------------------------------------------------
# The conv taps need result[:, i] = x[:, i + d].  pltpu.roll is the right primitive
# (XLU lane rotation), but to be robust across backends/versions we determine its
# rotation convention once with a tiny probe kernel and cache the sign.
_ROLL_SIGN = None


def _get_roll_sign():
    global _ROLL_SIGN
    if _ROLL_SIGN is None:
        def probe(x_ref, o_ref):
            o_ref[...] = pltpu.roll(x_ref[...], shift=1, axis=1)

        x = jnp.tile(jnp.arange(128, dtype=jnp.float32)[None, :], (8, 1))
        y = pl.pallas_call(
            probe, out_shape=jax.ShapeDtypeStruct((8, 128), jnp.float32)
        )(x)
        # jnp.roll convention: out[i] = x[i - shift]  ->  out[1] == x[0] == 0, and to
        # realize result[i] = x[i + d] we must pass shift = -d  (sign = -1).
        _ROLL_SIGN = -1 if float(y[0, 1]) == 0.0 else 1
    return _ROLL_SIGN


# ----------------------------------------------------------------------------
# Fused kernel (built as a closure over the static spatial shape)
# ----------------------------------------------------------------------------
def _make_kernel(H, W, roll_sign):
    HW = H * W

    def _shifted(x, d):
        # t[:, i] = x[:, (i + d) mod HW]; wrapped entries are zeroed by the masks.
        if d == 0:
            return x
        return pltpu.roll(x, shift=(roll_sign * d) % HW, axis=1)

    def kernel(x_ref, wi1, bi1, wi2, bi2, wu1, bu1, wu2, bu2, wo, bo, o_ref):
        # --- boundary masks implementing "SAME" zero padding (one per tap) --------
        idx = lax.broadcasted_iota(jnp.int32, (1, HW), 1)
        hh = idx // W
        ww = idx % W
        row_ok = (hh >= 1, None, hh <= H - 2)   # dy = 0, 1, 2
        col_ok = (ww >= 1, None, ww <= W - 2)   # dx = 0, 1, 2
        masks = []
        for dy in range(3):
            for dx in range(3):
                m = None
                for c in (row_ok[dy], col_ok[dx]):
                    if c is not None:
                        m = c if m is None else (m & c)
                masks.append(None if m is None else m.astype(jnp.float32))

        # --- one 3x3 conv (+ folded BN bias + ReLU) as a single im2col matmul -----
        def conv3x3(x, w_ref, b_ref):
            taps = []
            for dy in range(3):
                for dx in range(3):
                    d = (dy - 1) * W + (dx - 1)
                    t = _shifted(x, d)
                    m = masks[dy * 3 + dx]
                    if m is not None:
                        t = t * m
                    taps.append(t)
            patches = jnp.concatenate(taps, axis=0)                 # (9*Cin, HW)
            y = jnp.dot(w_ref[...], patches,
                        preferred_element_type=jnp.float32)         # (Cout, HW)
            return jnp.maximum(y + b_ref[...], 0.0)

        xin = x_ref[0]                       # (16, HW)
        x_inc = xin[0:8, :]                  # channels fed to `inc`
        x_skip = xin[8:16, :]                # skip-connection channels

        h = conv3x3(x_inc, wi1, bi1)                   # inc conv1: 8  -> 16
        h = conv3x3(h, wi2, bi2)                       # inc conv2: 16 -> 16
        h = jnp.concatenate([h, x_skip], axis=0)       # cat -> 24 ch (VMEM value only)
        h = conv3x3(h, wu1, bu1)                       # up4 conv1: 24 -> 16
        h = conv3x3(h, wu2, bu2)                       # up4 conv2: 16 -> 16
        y = jnp.dot(wo[...], h,
                    preferred_element_type=jnp.float32) + bo[...]   # outc 1x1: 16 -> 2
        o_ref[0] = y.astype(o_ref.dtype)

    return kernel


# ----------------------------------------------------------------------------
# Wrapper
# ----------------------------------------------------------------------------
def _fold_conv3x3(w_hwio, scale, bias):
    """HWIO (3,3,Cin,Cout) -> (Cout, 9*Cin) with eval-mode BN scale folded in."""
    cout = w_hwio.shape[-1]
    wf = jnp.transpose(w_hwio, (3, 0, 1, 2)).reshape(cout, -1)   # col = (dy*3+dx)*Cin+cin
    wf = wf * scale[:, None]
    return wf.astype(jnp.float32), bias.reshape(cout, 1).astype(jnp.float32)


def net_convert_short_forward(x_nchw, p):
    """Pallas implementation of NetConvertShort.forward. Input/output are NCHW."""
    N, C, H, W = x_nchw.shape
    HW = H * W
    x = x_nchw.reshape(N, C, HW)            # metadata-only: spatial already on lanes

    wi1, bi1 = _fold_conv3x3(p["inc_w1"], p["inc_s1"], p["inc_b1"])
    wi2, bi2 = _fold_conv3x3(p["inc_w2"], p["inc_s2"], p["inc_b2"])
    wu1, bu1 = _fold_conv3x3(p["up_w1"], p["up_s1"], p["up_b1"])
    wu2, bu2 = _fold_conv3x3(p["up_w2"], p["up_s2"], p["up_b2"])
    wo = jnp.transpose(p["out_w"]).astype(jnp.float32)            # (2, 16)
    bo = p["out_b"].reshape(-1, 1).astype(jnp.float32)            # (2, 1)
    Cout = wo.shape[0]

    kernel = _make_kernel(H, W, _get_roll_sign())
    const = lambda n: (0, 0)

    out = pl.pallas_call(
        kernel,
        out_shape=jax.ShapeDtypeStruct((N, Cout, HW), x.dtype),
        grid_spec=pltpu.PrefetchScalarGridSpec(
            num_scalar_prefetch=0,
            grid=(N,),
            in_specs=[
                pl.BlockSpec((1, C, HW), lambda n: (n, 0, 0)),
                pl.BlockSpec(wi1.shape, const), pl.BlockSpec(bi1.shape, const),
                pl.BlockSpec(wi2.shape, const), pl.BlockSpec(bi2.shape, const),
                pl.BlockSpec(wu1.shape, const), pl.BlockSpec(bu1.shape, const),
                pl.BlockSpec(wu2.shape, const), pl.BlockSpec(bu2.shape, const),
                pl.BlockSpec(wo.shape, const), pl.BlockSpec(bo.shape, const),
            ],
            out_specs=pl.BlockSpec((1, Cout, HW), lambda n: (n, 0, 0)),
        ),
        compiler_params=pltpu.CompilerParams(dimension_semantics=("parallel",)),
    )(x, wi1, bi1, wi2, bi2, wu1, bu1, wu2, bu2, wo, bo)

    return out.reshape(N, Cout, H, W)       # metadata-only reshape back to NCHW


# ----------------------------------------------------------------------------
# Pure-JAX reference (for correctness check)
# ----------------------------------------------------------------------------
def _ref_cbr(h, w, s, b):
    y = lax.conv_general_dilated(h, w, (1, 1), "SAME",
                                 dimension_numbers=("NHWC", "HWIO", "NHWC"))
    return jnp.maximum(y * s + b, 0.0)


def ref_forward(x_nchw, p):
    x = jnp.transpose(x_nchw, (0, 2, 3, 1))
    h = _ref_cbr(x[..., 0:8], p["inc_w1"], p["inc_s1"], p["inc_b1"])
    h = _ref_cbr(h, p["inc_w2"], p["inc_s2"], p["inc_b2"])
    h = jnp.concatenate([h, x[..., 8:]], axis=-1)
    h = _ref_cbr(h, p["up_w1"], p["up_s1"], p["up_b1"])
    h = _ref_cbr(h, p["up_w2"], p["up_s2"], p["up_b2"])
    y = lax.conv_general_dilated(h, p["out_w"][None, None, :, :], (1, 1), "SAME",
                                 dimension_numbers=("NHWC", "HWIO", "NHWC")) + p["out_b"]
    return jnp.transpose(y, (0, 3, 1, 2))


# ----------------------------------------------------------------------------
# Deterministic parameter init (synthetic; eval-mode BN folded to scale/bias)
# ----------------------------------------------------------------------------
def _init_conv3x3(key, cin, cout):
    return (jax.random.normal(key, (3, 3, cin, cout), jnp.float32)
            / jnp.sqrt(9.0 * cin))


def _init_bn_folded(key, c, eps=1e-5):
    k1, k2, k3, k4 = jax.random.split(key, 4)
    gamma = 1.0 + 0.1 * jax.random.normal(k1, (c,), jnp.float32)
    beta = 0.1 * jax.random.normal(k2, (c,), jnp.float32)
    mean = 0.1 * jax.random.normal(k3, (c,), jnp.float32)
    var = 0.5 + jax.random.uniform(k4, (c,), jnp.float32)
    scale = gamma / jnp.sqrt(var + eps)
    bias = beta - mean * scale
    return scale, bias


def make_params(key):
    C_inc, C_cat, C_mid, C_out = 16, 24, 16, 2
    ks = jax.random.split(key, 16)
    p = {}
    p["inc_w1"] = _init_conv3x3(ks[0], 8, C_inc)
    p["inc_s1"], p["inc_b1"] = _init_bn_folded(ks[1], C_inc)
    p["inc_w2"] = _init_conv3x3(ks[2], C_inc, C_inc)
    p["inc_s2"], p["inc_b2"] = _init_bn_folded(ks[3], C_inc)
    p["up_w1"] = _init_conv3x3(ks[4], C_cat, C_mid)
    p["up_s1"], p["up_b1"] = _init_bn_folded(ks[5], C_mid)
    p["up_w2"] = _init_conv3x3(ks[6], C_mid, C_mid)
    p["up_s2"], p["up_b2"] = _init_bn_folded(ks[7], C_mid)
    p["out_w"] = (jax.random.normal(ks[8], (C_mid, C_out), jnp.float32)
                  / jnp.sqrt(float(C_mid)))
    p["out_b"] = 0.1 * jax.random.normal(ks[9], (C_out,), jnp.float32)
    return p
    # TODO(synk): train-mode BatchNorm running-stat updates have no Pallas equivalent
    # here; eval-mode BN (folded scale/bias) is what is implemented.


if __name__ == "__main__":
    key = jax.random.PRNGKey(0)
    k_x, k_p = jax.random.split(key)

    # PyTorch-convention NCHW input: 8 channels for inc + 8 "upsampled" channels to concat.
    N, C, H, W = 2, 16, 16, 16
    x = jax.random.normal(k_x, (N, C, H, W), jnp.float32)
    params = make_params(k_p)

    out = jax.block_until_ready(net_convert_short_forward(x, params))
    ref = jax.block_until_ready(ref_forward(x, params))

    assert out.shape == (N, 2, H, W), out.shape
    np.testing.assert_allclose(np.asarray(out), np.asarray(ref), rtol=1e-2, atol=1e-2)
    print("KERNEL_OK")
</pallas_src>

<mosaic_0001>
module attributes {stable_mosaic.version = 11 : i64} {
  func.func @probe(%arg0: memref<8x128xf32, #tpu.memory_space<vmem>>, %arg1: memref<8x128xf32, #tpu.memory_space<vmem>>) attributes {dimension_semantics = [], scalar_prefetch = 0 : i64, scratch_operands = 0 : i64, tpu.core_type = #tpu.core_type<tc>} {
    %c0 = arith.constant 0 : index
    %c0_0 = arith.constant 0 : index
    %0 = vector.load %arg0[%c0, %c0_0] : memref<8x128xf32, #tpu.memory_space<vmem>>, vector<8x128xf32>
    %c1_i32 = arith.constant 1 : i32
    %1 = tpu.dynamic_rotate %0 by %c1_i32 dim 1 : vector<8x128xf32>, i32 -> vector<8x128xf32>
    %c0_1 = arith.constant 0 : index
    %c0_2 = arith.constant 0 : index
    %2 = vector.load %arg1[%c0_1, %c0_2] : memref<8x128xf32, #tpu.memory_space<vmem>>, vector<8x128xf32>
    tpu.vector_store %arg1[%c0_1, %c0_2], %1 {strides = array<i32>} : memref<8x128xf32, #tpu.memory_space<vmem>>, vector<8x128xf32>,
    return
  }
}

</mosaic_0001>

<llo_original>
// kernel: tpu_custom_call.1
$region0: #{tpu_custom_call.1}
  #allocation0 [shape = 'u32[]', space=smem, size = 0x4, offset = 0x4, fixed_abs, tag = 'smem constant byte address 0x4 - core index']
  #allocation1 [shape = 'u32[144,128]{1,0:T(1,128)}', space=vmem, size = 0x12000, scoped, tag = 'internal scratch']
  %s0 = inlined_call_operand.hbm [shape: f32[8,128], index: 0, kind: input, shape index: {}]
  %s1 = inlined_call_operand.hbm [shape: f32[8,128], index: 1, kind: output, shape index: {}]
  %s2 = sld [smem:[#allocation0]]
  $region18: #{tpu_custom_call.1} parent=0
    _
  %s4 = ssub.s32 1, %s2
  %s5 = scalar_select 0, %s4, %s2
  $region1: #{tpu_custom_call.1} parent=0
    #allocation2 [shape = 'u8[4096]{0}', space=vmem, size = 0x1000, scoped, tag = 'input window, operand 0, single buffered']
    #allocation3 [shape = 's32[1]{0}', space=sflag, size = 0x4, scoped, tag = 'scoped memory for tpu_custom_call.1']
    #allocation4 [shape = 's32[1]{0}', space=sflag, size = 0x4, scoped, tag = 'scoped memory for tpu_custom_call.1']
    #allocation5 [shape = 'u8[4096]{0}', space=vmem, size = 0x1000, scoped, tag = 'output window, operand 0, single buffered']
    %6 = vsyncpa [#allocation3], 0
    %7 = vsyncpa [#allocation4], 0
    // Predicated region
    $region2: #{tpu_custom_call.1} parent=1 // pred_check
      _
    $region3: #{tpu_custom_call.1} parent=1 // pred_check_branch
      %9 = sbr.rel (0) target = $region5
    $region4: #{tpu_custom_call.1} parent=1 // pred_region
      %s11 = ssub.s32 128, 128
      %12 = vsyncadd [#allocation3], %s11
      %s14 = sshll.u32 [#allocation2], 4
      %s15 = int_to_ptr.vmem [resolvable:$true] %s14
      %17 = dma.hbm_to_vmem [thread:$0]  %s0, 128, %s15, [#allocation3]
    $region5: #{tpu_custom_call.1} parent=1 // pred_fallthru
      _
    // Predicated region
    $region6: #{tpu_custom_call.1} parent=1 // pred_check
      _
    $region7: #{tpu_custom_call.1} parent=1 // pred_check_branch
      %19 = sbr.rel (0) target = $region9
    $region8: #{tpu_custom_call.1} parent=1 // pred_region
      %20 = dma.done [#allocation3], 128
    $region9: #{tpu_custom_call.1} parent=1 // pred_fallthru
      _
    %v21 = vld [vmem:[#allocation2] sm:$0xff]
    %22 = vrot.lane.b32.xlu0 %v21, 1
    %v23 = vpop.permute.xlu0 %22
    %24 = vst [vmem:[#allocation5] sm:$0xff] %v23
    // Predicated region
    $region10: #{tpu_custom_call.1} parent=1 // pred_check
      _
    $region11: #{tpu_custom_call.1} parent=1 // pred_check_branch
      %26 = sbr.rel (0) target = $region13
    $region12: #{tpu_custom_call.1} parent=1 // pred_region
      %s28 = ssub.s32 128, 128
      %29 = vsyncadd [#allocation4], %s28
      %s31 = sshll.u32 [#allocation5], 4
      %s32 = int_to_ptr.vmem [resolvable:$true] %s31
      %34 = dma.vmem_to_hbm [thread:$0]  %s32, 128, %s1, [#allocation4]
    $region13: #{tpu_custom_call.1} parent=1 // pred_fallthru
      _
    // Predicated region
    $region14: #{tpu_custom_call.1} parent=1 // pred_check
      _
    $region15: #{tpu_custom_call.1} parent=1 // pred_check_branch
      %36 = sbr.rel (0) target = $region17
    $region16: #{tpu_custom_call.1} parent=1 // pred_region
      %37 = dma.done [#allocation4], 128
    $region17: #{tpu_custom_call.1} parent=1 // pred_fallthru
      _
    %38 = vsyncpa [#allocation3], 1
    %39 = vsyncpa [#allocation4], 1

</llo_original>
